<compile_context>
chip_gen: v6e
topology: v6e:2x2x1
jax: 0.10.0
libtpu: 0.0.40
codegen_flags: <defaults>
</compile_context>

<pallas_src>
import math

import jax
import jax.numpy as jnp
from jax.experimental import pallas as pl
from jax.experimental.pallas import tpu as pltpu

BN_EPS = 1e-5     # torch.nn.BatchNorm1d default eps
ADJ_EPS = 1e-10   # eps in the standard normalize_A


def normalize_adj_kernel(adj_ref, l_ref):
    """One-time adjacency prep: L = D^-1/2 relu(A) D^-1/2, stored in bf16.

    Column scaling is folded into L here (one-time O(N^2)) so the hot GCN
    kernel never touches dinv.
    """
    # TODO(synk): normalize_A is not included in the PyTorch source snippet;
    # using the standard DGCNN definition (relu + symmetric D^-1/2 A D^-1/2).
    n = adj_ref.shape[0]
    ar = jnp.maximum(adj_ref[...], 0.0)                       # relu(A), (N, N) f32
    deg = jnp.sum(ar, axis=1, keepdims=True)                  # (N, 1) row degrees
    dinv = jax.lax.rsqrt(deg + ADJ_EPS)                       # (N, 1)
    # Lay the same dinv out along lanes WITHOUT an XLU transpose: scatter it
    # onto the diagonal (iota/where) and reduce over the sublane axis.
    ii = jax.lax.broadcasted_iota(jnp.int32, (n, n), 0)
    jj = jax.lax.broadcasted_iota(jnp.int32, (n, n), 1)
    dinv_lanes = jnp.sum(jnp.where(ii == jj, dinv, 0.0),
                         axis=0, keepdims=True)               # (1, N)
    # bf16 adjacency: native MXU rate, half the resident VMEM footprint.
    # NOTE: at real graph sizes (N >= 2048) this prep and the hot kernel should
    # additionally tile L over row blocks (tn, N); unnecessary at test sizes.
    l_ref[...] = (ar * dinv * dinv_lanes).astype(l_ref.dtype)


def gcn_block_kernel(x_ref, l_ref, w1_ref, w2_ref, scale_ref, shift_ref, out_ref):
    """One batch block per grid step: BN affine -> GCN layer 1 -> GCN layer 2.

    L / W1 / W2 / scale / shift have constant index maps -> VMEM resident.
    MXU inputs are bf16 (f32 accumulation); elementwise math stays f32.
    """
    bB, n, _ = x_ref.shape
    L = l_ref[...]                                             # (N, N) bf16

    # BatchNorm1d with precomputed (scale, shift); f32 VPU math, bf16 at the MXU.
    xbn = (x_ref[...] * scale_ref[...] + shift_ref[...]).astype(jnp.bfloat16)  # (bB,N,F)

    # Layer 1, reassociated: (L @ x) @ W1  (F <= H -> cheaper L-matmul).  The
    # per-batch L aggregations are small static 2-D dots; their results are
    # concatenated into a (bB*N, F) slab so the dense weight matmuls run with
    # M = bB*N fused rows (fills MXU sublanes, amortizes per-step overhead).
    agg1 = jnp.concatenate(
        [jnp.dot(L, xbn[b], preferred_element_type=jnp.float32) for b in range(bB)],
        axis=0)                                                # (bB*N, F) f32
    h1 = jnp.maximum(
        jnp.dot(agg1.astype(jnp.bfloat16), w1_ref[...],
                preferred_element_type=jnp.float32), 0.0)      # (bB*N, Hp) f32

    # Layer 2: L @ (h1 @ W2).  (GraphConvolution.bias is declared but never
    # used in the PyTorch forward -> omitted.)
    s2 = jnp.dot(h1.astype(jnp.bfloat16), w2_ref[...],
                 preferred_element_type=jnp.float32).astype(jnp.bfloat16)  # (bB*N, Hp)
    for b in range(bB):
        # Hp is a multiple of 128 -> every store is an unmasked lane-dense vst.
        out_ref[b] = jnp.dot(L, s2[b * n:(b + 1) * n],
                             preferred_element_type=jnp.float32).astype(out_ref.dtype)


def _vmem_capacity_bytes():
    try:
        return int(pltpu.get_tpu_info().vmem_capacity_bytes)
    except Exception:
        return 64 * 2**20   # v7x per-TensorCore VMEM: the smallest across generations


def gnn_forward(x, adj, w1, w2, gamma, beta):
    B, N, F = x.shape
    H = w1.shape[1]
    f32, bf16 = jnp.float32, jnp.bfloat16

    # ---- One-time BatchNorm1d statistics (training mode, biased variance). ----
    # Plain-JAX two-pass mean/var over (B, N): a trivial HBM-roofline reduction,
    # never staged as a single full-x VMEM block.  Folded into per-feature
    # (scale, shift) so the hot kernel does one fused multiply-add.
    mean = jnp.mean(x, axis=(0, 1)).reshape(1, F)
    var = jnp.mean((x - mean.reshape(1, 1, F)) ** 2, axis=(0, 1)).reshape(1, F)
    scale = (gamma.reshape(1, F) * jax.lax.rsqrt(var + BN_EPS)).astype(f32)
    shift = (beta.reshape(1, F) - mean * scale).astype(f32)

    # ---- One-time adjacency normalization (Pallas prep kernel, bf16 L). ----
    vmem = pl.BlockSpec(memory_space=pltpu.MemorySpace.VMEM)
    L = pl.pallas_call(
        normalize_adj_kernel,
        out_shape=jax.ShapeDtypeStruct((N, N), bf16),
        in_specs=[vmem],
        out_specs=vmem,
    )(adj)

    # ---- Pad the hidden dim to a lane-dense multiple of 128 (exact: the padded
    # W1 columns / W2 rows+columns are zero, so the extra outputs are zero). ----
    Hp = ((H + 127) // 128) * 128
    if Hp != H:
        w1 = jnp.zeros((F, Hp), f32).at[:, :H].set(w1)
        w2 = jnp.zeros((Hp, Hp), f32).at[:H, :H].set(w2)
    w1b, w2b = w1.astype(bf16), w2.astype(bf16)

    # ---- Batch blocking: largest divisor of B up to 8 per grid step. ----
    bB = next(c for c in (8, 4, 2, 1) if B % c == 0)
    grid = (B // bB,)

    # ---- VMEM budget: derive the cap from the hardware (v7x = 64 MiB / TC). ----
    cap = _vmem_capacity_bytes()
    per_step = (
        2 * (bB * N * F + bB * N * Hp) * 4          # double-buffered x / out blocks
        + 2 * (N * N + F * Hp + Hp * Hp) * 2        # bf16 L / W1 / W2 (+ buffering slack)
        + 2 * 2 * F * 4                             # BN scale / shift
        + 4 * bB * N * Hp * 4                       # in-kernel f32 intermediates headroom
    )
    vmem_limit = int(min(0.75 * cap, max(32 * 2**20, 2 * per_step)))

    out = pl.pallas_call(
        gcn_block_kernel,
        out_shape=jax.ShapeDtypeStruct((B, N, Hp), f32),
        grid_spec=pltpu.PrefetchScalarGridSpec(
            num_scalar_prefetch=0,
            grid=grid,
            in_specs=[
                pl.BlockSpec((bB, N, F), lambda i: (i, 0, 0)),   # per-step x block
                # Constant index maps -> resident across the grid (the pipeliner
                # skips re-DMA of blocks whose index does not change).
                pl.BlockSpec((N, N), lambda i: (0, 0)),          # L (bf16)
                pl.BlockSpec((F, Hp), lambda i: (0, 0)),         # W1 (bf16)
                pl.BlockSpec((Hp, Hp), lambda i: (0, 0)),        # W2 (bf16)
                pl.BlockSpec((1, F), lambda i: (0, 0)),          # BN scale
                pl.BlockSpec((1, F), lambda i: (0, 0)),          # BN shift
            ],
            out_specs=pl.BlockSpec((bB, N, Hp), lambda i: (i, 0, 0)),
        ),
        compiler_params=pltpu.CompilerParams(
            dimension_semantics=("parallel",),   # megacore split on v7x; harmless on v5e/v6e
            vmem_limit_bytes=vmem_limit,
        ),
    )(x, L, w1b, w2b, scale, shift)

    if Hp != H:
        out = out[..., :H]
    # Row-major (B, N, H) -> (B, N*H): matches `result.reshape(x.shape[0], -1)`.
    return out.reshape(B, N * H)


def gnn_reference(x, adj, w1, w2, gamma, beta):
    """Pure-JAX f32 reference matching the PyTorch forward (training-mode BN)."""
    B, N, F = x.shape
    mean = jnp.mean(x, axis=(0, 1), keepdims=True)
    var = jnp.mean((x - mean) ** 2, axis=(0, 1), keepdims=True)
    xbn = (x - mean) / jnp.sqrt(var + BN_EPS) * gamma.reshape(1, 1, F) \
        + beta.reshape(1, 1, F)
    Ar = jnp.maximum(adj, 0.0)
    d = jnp.sum(Ar, axis=1, keepdims=True)
    dinv = 1.0 / jnp.sqrt(d + ADJ_EPS)
    L = dinv * Ar * dinv.T
    h1 = jnp.maximum(jnp.einsum('nm,bmh->bnh', L, xbn @ w1), 0.0)
    h2 = jnp.einsum('nm,bmh->bnh', L, h1 @ w2)
    return h2.reshape(B, -1)


def xavier_uniform(key, shape, gain):
    fan_in, fan_out = shape
    a = gain * math.sqrt(6.0 / (fan_in + fan_out))
    return jax.random.uniform(key, shape, jnp.float32, minval=-a, maxval=a)


if __name__ == "__main__":
    key = jax.random.PRNGKey(0)
    B, N, Fdim, H = 2, 8, 16, 32          # batch, nodes, input feat, num_out
    kx, ka, k1, k2 = jax.random.split(key, 4)

    x = jax.random.normal(kx, (B, N, Fdim), jnp.float32)
    adj = jax.random.normal(ka, (N, N), jnp.float32)

    # GCN weights: xavier_uniform_ with gain=sqrt(2); BN affine: gamma=1, beta=0.
    w1 = xavier_uniform(k1, (Fdim, H), math.sqrt(2.0))
    w2 = xavier_uniform(k2, (H, H), math.sqrt(2.0))
    gamma = jnp.ones((1, Fdim), jnp.float32)
    beta = jnp.zeros((1, Fdim), jnp.float32)

    fwd = jax.jit(gnn_forward)
    out = fwd(x, adj, w1, w2, gamma, beta)
    jax.block_until_ready(out)
    assert out.shape == (B, N * H) and out.dtype == jnp.float32

    ref = gnn_reference(x, adj, w1, w2, gamma, beta)
    # bf16 MXU inputs (f32 accumulation) vs. an all-f32 reference -> looser tol.
    assert jnp.allclose(out, ref, rtol=2e-2, atol=2e-2), "kernel/reference mismatch"

    print("KERNEL_OK")
</pallas_src>

<mosaic_0001>
module attributes {stable_mosaic.version = 11 : i64} {
  func.func @normalize_adj_kernel(%arg0: memref<8x8xf32, #tpu.memory_space<vmem>>, %arg1: memref<8x8xbf16, #tpu.memory_space<vmem>>) attributes {dimension_semantics = [], scalar_prefetch = 0 : i64, scratch_operands = 0 : i64, tpu.core_type = #tpu.core_type<tc>} {
    %c0 = arith.constant 0 : index
    %c0_0 = arith.constant 0 : index
    %0 = vector.load %arg0[%c0, %c0_0] : memref<8x8xf32, #tpu.memory_space<vmem>>, vector<8x8xf32>
    %cst = arith.constant 0.000000e+00 : f32
    %1 = vector.broadcast %cst : f32 to vector<8x8xf32>
    %2 = arith.maximumf %0, %1 : vector<8x8xf32>
    %cst_1 = arith.constant dense<0.000000e+00> : vector<8xf32>
    %3 = vector.multi_reduction <add>, %2, %cst_1 [1] : vector<8x8xf32> to vector<8xf32>
    %4 = vector.shape_cast %3 : vector<8xf32> to vector<8x1xf32>
    %cst_2 = arith.constant 1.000000e-10 : f32
    %5 = vector.broadcast %cst_2 : f32 to vector<8x1xf32>
    %6 = arith.addf %4, %5 : vector<8x1xf32>
    %7 = math.rsqrt %6 : vector<8x1xf32>
    %8 = tpu.iota {dimensions = array<i32: 0>} : vector<8x8xi32>
    %9 = tpu.iota {dimensions = array<i32: 1>} : vector<8x8xi32>
    %10 = arith.cmpi eq, %8, %9 : vector<8x8xi32>
    %cst_3 = arith.constant 0.000000e+00 : f32
    %11 = vector.shape_cast %7 : vector<8x1xf32> to vector<8x1xf32>
    %12 = vector.broadcast %11 : vector<8x1xf32> to vector<8x8xf32>
    %13 = vector.broadcast %cst_3 : f32 to vector<8x8xf32>
    %14 = arith.select %10, %12, %13 : vector<8x8xi1>, vector<8x8xf32>
    %cst_4 = arith.constant dense<0.000000e+00> : vector<8xf32>
    %15 = vector.multi_reduction <add>, %14, %cst_4 [0] : vector<8x8xf32> to vector<8xf32>
    %16 = vector.shape_cast %15 : vector<8xf32> to vector<1x8xf32>
    %17 = vector.broadcast %7 : vector<8x1xf32> to vector<8x8xf32>
    %18 = arith.mulf %2, %17 : vector<8x8xf32>
    %19 = vector.broadcast %16 : vector<1x8xf32> to vector<8x8xf32>
    %20 = arith.mulf %18, %19 : vector<8x8xf32>
    %21 = arith.truncf %20 : vector<8x8xf32> to vector<8x8xbf16>
    %c0_5 = arith.constant 0 : index
    %c0_6 = arith.constant 0 : index
    %22 = vector.load %arg1[%c0_5, %c0_6] : memref<8x8xbf16, #tpu.memory_space<vmem>>, vector<8x8xbf16>
    tpu.vector_store %arg1[%c0_5, %c0_6], %21 {strides = array<i32>} : memref<8x8xbf16, #tpu.memory_space<vmem>>, vector<8x8xbf16>,
    return
  }
}

module attributes {stable_mosaic.version = 11 : i64} {
  func.func @gcn_block_kernel(%arg0: i32, %arg1: memref<2x8x16xf32, #tpu.memory_space<vmem>>, %arg2: memref<8x8xbf16, #tpu.memory_space<vmem>>, %arg3: memref<16x128xbf16, #tpu.memory_space<vmem>>, %arg4: memref<128x128xbf16, #tpu.memory_space<vmem>>, %arg5: memref<1x16xf32, #tpu.memory_space<vmem>>, %arg6: memref<1x16xf32, #tpu.memory_space<vmem>>, %arg7: memref<2x8x128xf32, #tpu.memory_space<vmem>>) attributes {dimension_semantics = [#tpu.dimension_semantics<parallel>], iteration_bounds = array<i64: 1>, scalar_prefetch = 0 : i64, scratch_operands = 0 : i64, tpu.core_type = #tpu.core_type<tc>, window_params = [{transform_indices = @transform_0, window_bounds = array<i64: 2, 8, 16>}, {pipeline_mode = #tpu.pipeline_mode<synchronous>, transform_indices = @transform_1, window_bounds = array<i64: 8, 8>}, {pipeline_mode = #tpu.pipeline_mode<synchronous>, transform_indices = @transform_2, window_bounds = array<i64: 16, 128>}, {pipeline_mode = #tpu.pipeline_mode<synchronous>, transform_indices = @transform_3, window_bounds = array<i64: 128, 128>}, {pipeline_mode = #tpu.pipeline_mode<synchronous>, transform_indices = @transform_4, window_bounds = array<i64: 1, 16>}, {pipeline_mode = #tpu.pipeline_mode<synchronous>, transform_indices = @transform_5, window_bounds = array<i64: 1, 16>}, {transform_indices = @transform_6, window_bounds = array<i64: 2, 8, 128>}]} {
    %c0 = arith.constant 0 : index
    %c0_0 = arith.constant 0 : index
    %0 = vector.load %arg2[%c0, %c0_0] : memref<8x8xbf16, #tpu.memory_space<vmem>>, vector<8x8xbf16>
    %c0_1 = arith.constant 0 : index
    %c0_2 = arith.constant 0 : index
    %c0_3 = arith.constant 0 : index
    %1 = vector.load %arg1[%c0_1, %c0_2, %c0_3] : memref<2x8x16xf32, #tpu.memory_space<vmem>>, vector<2x8x16xf32>
    %c0_4 = arith.constant 0 : index
    %c0_5 = arith.constant 0 : index
    %2 = vector.load %arg5[%c0_4, %c0_5] : memref<1x16xf32, #tpu.memory_space<vmem>>, vector<1x16xf32>
    %3 = vector.shape_cast %2 : vector<1x16xf32> to vector<1x1x16xf32>
    %4 = vector.broadcast %3 : vector<1x1x16xf32> to vector<2x8x16xf32>
    %5 = arith.mulf %1, %4 : vector<2x8x16xf32>
    %c0_6 = arith.constant 0 : index
    %c0_7 = arith.constant 0 : index
    %6 = vector.load %arg6[%c0_6, %c0_7] : memref<1x16xf32, #tpu.memory_space<vmem>>, vector<1x16xf32>
    %7 = vector.shape_cast %6 : vector<1x16xf32> to vector<1x1x16xf32>
    %8 = vector.broadcast %7 : vector<1x1x16xf32> to vector<2x8x16xf32>
    %9 = arith.addf %5, %8 : vector<2x8x16xf32>
    %10 = arith.truncf %9 : vector<2x8x16xf32> to vector<2x8x16xbf16>
    %11 = vector.extract_strided_slice %10 {offsets = [0, 0, 0], sizes = [1, 8, 16], strides = [1, 1, 1]} : vector<2x8x16xbf16> to vector<1x8x16xbf16>
    %12 = vector.shape_cast %11 : vector<1x8x16xbf16> to vector<8x16xbf16>
    %cst = arith.constant dense<0.000000e+00> : vector<8x16xf32>
    %13 = tpu.matmul %0, %12, %cst {dimension_numbers = #tpu.dot_dimension_numbers<[1], [0], [0], [1], [0, 0, 1, 1], [], []>} : vector<8x8xbf16>, vector<8x16xbf16>, vector<8x16xf32> -> vector<8x16xf32>
    %14 = vector.extract_strided_slice %10 {offsets = [1, 0, 0], sizes = [1, 8, 16], strides = [1, 1, 1]} : vector<2x8x16xbf16> to vector<1x8x16xbf16>
    %15 = vector.shape_cast %14 : vector<1x8x16xbf16> to vector<8x16xbf16>
    %cst_8 = arith.constant dense<0.000000e+00> : vector<8x16xf32>
    %16 = tpu.matmul %0, %15, %cst_8 {dimension_numbers = #tpu.dot_dimension_numbers<[1], [0], [0], [1], [0, 0, 1, 1], [], []>} : vector<8x8xbf16>, vector<8x16xbf16>, vector<8x16xf32> -> vector<8x16xf32>
    %17 = tpu.concatenate %13, %16 in 0 : vector<8x16xf32>, vector<8x16xf32> -> vector<16x16xf32>
    %18 = arith.truncf %17 : vector<16x16xf32> to vector<16x16xbf16>
    %c0_9 = arith.constant 0 : index
    %c0_10 = arith.constant 0 : index
    %19 = vector.load %arg3[%c0_9, %c0_10] : memref<16x128xbf16, #tpu.memory_space<vmem>>, vector<16x128xbf16>
    %cst_11 = arith.constant dense<0.000000e+00> : vector<16x128xf32>
    %20 = tpu.matmul %18, %19, %cst_11 {dimension_numbers = #tpu.dot_dimension_numbers<[1], [0], [0], [1], [0, 0, 1, 1], [], []>} : vector<16x16xbf16>, vector<16x128xbf16>, vector<16x128xf32> -> vector<16x128xf32>
    %cst_12 = arith.constant 0.000000e+00 : f32
    %21 = vector.broadcast %cst_12 : f32 to vector<16x128xf32>
    %22 = arith.maximumf %20, %21 : vector<16x128xf32>
    %23 = arith.truncf %22 : vector<16x128xf32> to vector<16x128xbf16>
    %c0_13 = arith.constant 0 : index
    %c0_14 = arith.constant 0 : index
    %24 = vector.load %arg4[%c0_13, %c0_14] : memref<128x128xbf16, #tpu.memory_space<vmem>>, vector<128x128xbf16>
    %cst_15 = arith.constant dense<0.000000e+00> : vector<16x128xf32>
    %25 = tpu.matmul %23, %24, %cst_15 {dimension_numbers = #tpu.dot_dimension_numbers<[1], [0], [0], [1], [0, 0, 1, 1], [], []>} : vector<16x128xbf16>, vector<128x128xbf16>, vector<16x128xf32> -> vector<16x128xf32>
    %26 = arith.truncf %25 : vector<16x128xf32> to vector<16x128xbf16>
    %27 = vector.extract_strided_slice %26 {offsets = [0, 0], sizes = [8, 128], strides = [1, 1]} : vector<16x128xbf16> to vector<8x128xbf16>
    %cst_16 = arith.constant dense<0.000000e+00> : vector<8x128xf32>
    %28 = tpu.matmul %0, %27, %cst_16 {dimension_numbers = #tpu.dot_dimension_numbers<[1], [0], [0], [1], [0, 0, 1, 1], [], []>} : vector<8x8xbf16>, vector<8x128xbf16>, vector<8x128xf32> -> vector<8x128xf32>
    %c0_17 = arith.constant 0 : index
    %c0_18 = arith.constant 0 : index
    %c0_19 = arith.constant 0 : index
    %29 = vector.load %arg7[%c0_17, %c0_18, %c0_19] : memref<2x8x128xf32, #tpu.memory_space<vmem>>, vector<1x8x128xf32>
    %30 = vector.shape_cast %29 : vector<1x8x128xf32> to vector<8x128xf32>
    %31 = vector.shape_cast %28 : vector<8x128xf32> to vector<1x8x128xf32>
    tpu.vector_store %arg7[%c0_17, %c0_18, %c0_19], %31 {strides = array<i32>} : memref<2x8x128xf32, #tpu.memory_space<vmem>>, vector<1x8x128xf32>,
    %32 = vector.extract_strided_slice %26 {offsets = [8, 0], sizes = [8, 128], strides = [1, 1]} : vector<16x128xbf16> to vector<8x128xbf16>
    %cst_20 = arith.constant dense<0.000000e+00> : vector<8x128xf32>
    %33 = tpu.matmul %0, %32, %cst_20 {dimension_numbers = #tpu.dot_dimension_numbers<[1], [0], [0], [1], [0, 0, 1, 1], [], []>} : vector<8x8xbf16>, vector<8x128xbf16>, vector<8x128xf32> -> vector<8x128xf32>
    %c1 = arith.constant 1 : index
    %c0_21 = arith.constant 0 : index
    %c0_22 = arith.constant 0 : index
    %34 = vector.load %arg7[%c1, %c0_21, %c0_22] : memref<2x8x128xf32, #tpu.memory_space<vmem>>, vector<1x8x128xf32>
    %35 = vector.shape_cast %34 : vector<1x8x128xf32> to vector<8x128xf32>
    %36 = vector.shape_cast %33 : vector<8x128xf32> to vector<1x8x128xf32>
    tpu.vector_store %arg7[%c1, %c0_21, %c0_22], %36 {strides = array<i32>} : memref<2x8x128xf32, #tpu.memory_space<vmem>>, vector<1x8x128xf32>,
    return
  }
  func.func @transform_0(%arg0: i32) -> (i32, i32, i32) {
    %c0_i32 = arith.constant 0 : i32
    %c0_i32_0 = arith.constant 0 : i32
    %c0_i32_1 = arith.constant 0 : i32
    return %arg0, %c0_i32, %c0_i32_0 : i32, i32, i32
  }
  func.func @transform_1(%arg0: i32) -> (i32, i32) {
    %c0_i32 = arith.constant 0 : i32
    %c0_i32_0 = arith.constant 0 : i32
    %c0_i32_1 = arith.constant 0 : i32
    return %c0_i32, %c0_i32_0 : i32, i32
  }
  func.func @transform_2(%arg0: i32) -> (i32, i32) {
    %c0_i32 = arith.constant 0 : i32
    %c0_i32_0 = arith.constant 0 : i32
    %c0_i32_1 = arith.constant 0 : i32
    return %c0_i32, %c0_i32_0 : i32, i32
  }
  func.func @transform_3(%arg0: i32) -> (i32, i32) {
    %c0_i32 = arith.constant 0 : i32
    %c0_i32_0 = arith.constant 0 : i32
    %c0_i32_1 = arith.constant 0 : i32
    return %c0_i32, %c0_i32_0 : i32, i32
  }
  func.func @transform_4(%arg0: i32) -> (i32, i32) {
    %c0_i32 = arith.constant 0 : i32
    %c0_i32_0 = arith.constant 0 : i32
    %c0_i32_1 = arith.constant 0 : i32
    return %c0_i32, %c0_i32_0 : i32, i32
  }
  func.func @transform_5(%arg0: i32) -> (i32, i32) {
    %c0_i32 = arith.constant 0 : i32
    %c0_i32_0 = arith.constant 0 : i32
    %c0_i32_1 = arith.constant 0 : i32
    return %c0_i32, %c0_i32_0 : i32, i32
  }
  func.func @transform_6(%arg0: i32) -> (i32, i32, i32) {
    %c0_i32 = arith.constant 0 : i32
    %c0_i32_0 = arith.constant 0 : i32
    %c0_i32_1 = arith.constant 0 : i32
    return %arg0, %c0_i32, %c0_i32_0 : i32, i32, i32
  }
}

</mosaic_0001>

<llo_original>
// kernel: gnn_forward.2
$region0: #{gnn_forward.2}
  #allocation0 [shape = 'u32[]', space=smem, size = 0x4, offset = 0x4, fixed_abs, tag = 'smem constant byte address 0x4 - core index']
  #allocation1 [shape = 'u32[144,128]{1,0:T(1,128)}', space=vmem, size = 0x12000, scoped, tag = 'internal scratch']
  %s0 = inlined_call_operand.vmem [shape: f32[8,8], index: 0, kind: input, shape index: {}]
  %s1 = inlined_call_operand.vmem [shape: bf16[8,8], index: 1, kind: output, shape index: {}]
  %s2 = sld [smem:[#allocation0]]
  $region14: #{gnn_forward.2} parent=0
    _
  %s4 = ssub.s32 1, %s2
  %s5 = scalar_select 0, %s4, %s2
  // Predicated region
  $region2: #{gnn_forward.2} parent=0 // pred_check
    _
  $region3: #{gnn_forward.2} parent=0 // pred_check_branch
    %7 = sbr.rel (0) target = $region5
  $region4: #{gnn_forward.2} parent=0 // pred_region
    _
  $region5: #{gnn_forward.2} parent=0 // pred_fallthru
    _
  %v8 = vld [vmem:[%s0] sm:$0xff]
  %v9 = vmax.f32 %v8, 0.0
  %vm10 = vcmask 64512
  %v11 = vsel %vm10, %v9, 0.0
  %12 = vadd.xlane.f32.xlu0 %v11
  %v13 = vpop.xlane.xlu0 %12
  %v14 = vadd.f32 %v13, 1e-10
  %v15 = vrsqrt.pop %v14
  %v16 = vlaneseq
  %v17 = vshrl.u32 %v16, 7
  %v18 = vlaneseq
  %v19 = vand.u32 %v18, 127
  %vm20 = vcmp.eq.s32.totalorder %v17, %v19
  %v21 = vsel %vm20, %v15, 0.0
  %v22 = vsel %vm10, %v21, 0.0
  %v23 = vrot.slane %v22, 4
  %v24 = vadd.f32 %v22, %v23
  %v25 = vrot.slane %v24, 2
  %v26 = vadd.f32 %v24, %v25
  %v27 = vrot.slane %v26, 1
  %v28 = vadd.f32 %v26, %v27
  %v29 = vmul.f32 %v9, %v15
  %v30 = vmul.f32 %v29, %v28
  %v31 = vpack.c.bf16 %v30, %v30
  %vm32 = vcmask 60416
  %33 = vst.msk [vmem:[%s1] sm:$0xf] %vm32, %v31
  // Predicated region
  $region6: #{gnn_forward.2} parent=0 // pred_check
    _
  $region7: #{gnn_forward.2} parent=0 // pred_check_branch
    %35 = sbr.rel (0) target = $region9
  $region8: #{gnn_forward.2} parent=0 // pred_region
    _
  $region9: #{gnn_forward.2} parent=0 // pred_fallthru
    _
  // Predicated region
  $region10: #{gnn_forward.2} parent=0 // pred_check
    _
  $region11: #{gnn_forward.2} parent=0 // pred_check_branch
    %37 = sbr.rel (0) target = $region13
  $region12: #{gnn_forward.2} parent=0 // pred_region
    _
  $region13: #{gnn_forward.2} parent=0 // pred_fallthru
    _

// kernel: gnn_forward.3
$region0: #{gnn_forward.3}
  #allocation0 [shape = 'u32[]', space=smem, size = 0x4, offset = 0x4, fixed_abs, tag = 'smem constant byte address 0x4 - core index']
  #allocation1 [shape = 'u32[144,128]{1,0:T(1,128)}', space=vmem, size = 0x12000, scoped, tag = 'internal scratch']
  %s0 = inlined_call_operand.vmem [shape: f32[2,8,16], index: 0, kind: input, shape index: {}]
  %s1 = inlined_call_operand.vmem [shape: bf16[8,8], index: 1, kind: input, shape index: {}]
  %s2 = inlined_call_operand.vmem [shape: bf16[16,128], index: 2, kind: input, shape index: {}]
  %s3 = inlined_call_operand.vmem [shape: bf16[128,128], index: 3, kind: input, shape index: {}]
  %s4 = inlined_call_operand.vmem [shape: f32[1,16], index: 4, kind: input, shape index: {}]
  %s5 = inlined_call_operand.vmem [shape: f32[1,16], index: 5, kind: input, shape index: {}]
  %s6 = inlined_call_operand.vmem [shape: f32[2,8,128], index: 6, kind: output, shape index: {}]
  %s7 = sld [smem:[#allocation0]]
  $region34: #{gnn_forward.3} parent=0
    _
  %s9 = ssub.s32 1, %s7
  %s10 = scalar_select 0, %s9, %s7
  // Predicated region
  $region2: #{gnn_forward.3} parent=0 // pred_check
    _
  $region3: #{gnn_forward.3} parent=0 // pred_check_branch
    %12 = sbr.rel (0) target = $region5
  $region4: #{gnn_forward.3} parent=0 // pred_region
    _
  $region5: #{gnn_forward.3} parent=0 // pred_fallthru
    _
  // Predicated region
  $region6: #{gnn_forward.3} parent=0 // pred_check
    _
  $region7: #{gnn_forward.3} parent=0 // pred_check_branch
    %14 = sbr.rel (0) target = $region9
  $region8: #{gnn_forward.3} parent=0 // pred_region
    _
  $region9: #{gnn_forward.3} parent=0 // pred_fallthru
    _
  // Predicated region
  $region10: #{gnn_forward.3} parent=0 // pred_check
    _
  $region11: #{gnn_forward.3} parent=0 // pred_check_branch
    %16 = sbr.rel (0) target = $region13
  $region12: #{gnn_forward.3} parent=0 // pred_region
    _
  $region13: #{gnn_forward.3} parent=0 // pred_fallthru
    _
  // Predicated region
  $region14: #{gnn_forward.3} parent=0 // pred_check
    _
  $region15: #{gnn_forward.3} parent=0 // pred_check_branch
    %18 = sbr.rel (0) target = $region17
  $region16: #{gnn_forward.3} parent=0 // pred_region
    _
  $region17: #{gnn_forward.3} parent=0 // pred_fallthru
    _
  // Predicated region
  $region18: #{gnn_forward.3} parent=0 // pred_check
    _
  $region19: #{gnn_forward.3} parent=0 // pred_check_branch
    %20 = sbr.rel (0) target = $region21
  $region20: #{gnn_forward.3} parent=0 // pred_region
    _
  $region21: #{gnn_forward.3} parent=0 // pred_fallthru
    _
  // Predicated region
  $region22: #{gnn_forward.3} parent=0 // pred_check
    _
  $region23: #{gnn_forward.3} parent=0 // pred_check_branch
    %22 = sbr.rel (0) target = $region25
  $region24: #{gnn_forward.3} parent=0 // pred_region
    _
  $region25: #{gnn_forward.3} parent=0 // pred_fallthru
    _
  %v24 = vld [vmem:[%s1] sm:$0xf]
  %v25 = vld [vmem:[%s0] sm:$0xff]
  %v26 = vld [vmem:[%s0 + $0x8] sm:$0xff]
  %v27 = vld [vmem:[%s4] sm:$0x1]
  %v29 = vlaneseq
  %v30 = vshrl.u32 %v29, 7
  %v31 = vsub.s32 0, %v30
  %v32 = vrot.slane %v27, %v31
  %v34 = vmul.f32 %v25, %v32
  %v35 = vmul.f32 %v26, %v32
  %v36 = vld [vmem:[%s5] sm:$0x1]
  %v38 = vlaneseq
  %v39 = vshrl.u32 %v38, 7
  %v40 = vsub.s32 0, %v39
  %v41 = vrot.slane %v36, %v40
  %v43 = vadd.f32 %v34, %v41
  %v44 = vadd.f32 %v35, %v41
  %v45 = vpack.c.bf16 %v43, %v43
  %v46 = vpack.c.bf16 %v44, %v44
  %vm47 = vcmask 64512
  %v49 = vsel %vm47, %v24, 0
  %vm51 = vcmask 1043456
  %v53 = vsel %vm51, %v45, 0
  %55 = vmatprep.subr.bf16.mxu0 0
  %56 = vmatpush1.bf16.msra.mxu0 0
  %57 = vmatprep.subr.bf16.mxu0 0
  %58 = vmatpush1.bf16.msra.mxu0 0
  %59 = vmatprep.subr.bf16.mxu0 0
  %60 = vmatpush1.bf16.msra.mxu0 0
  %61 = vmatprep.subr.bf16.mxu0 0
  %62 = vmatpush1.bf16.msra.mxu0 0
  %63 = vmatprep.subr.bf16.mxu0 0
  %64 = vmatpush1.bf16.msra.mxu0 0
  %65 = vmatprep.subr.bf16.mxu0 0
  %66 = vmatpush1.bf16.msra.mxu0 0
  %67 = vmatprep.subr.bf16.mxu0 0
  %68 = vmatpush1.bf16.msra.mxu0 0
  %69 = vmatprep.subr.bf16.mxu0 0
  %70 = vmatpush1.bf16.msra.mxu0 %v53
  %71 = vmatprep.subr.bf16.mxu0 0
  %72 = vmatpush2.bf16.msra.mxu0 0
  %73 = vmatprep.subr.bf16.mxu0 0
  %74 = vmatpush2.bf16.msra.mxu0 0
  %75 = vmatprep.subr.bf16.mxu0 0
  %76 = vmatpush2.bf16.msra.mxu0 0
  %77 = vmatprep.subr.bf16.mxu0 0
  %78 = vmatpush2.bf16.msra.mxu0 0
  %79 = vmatprep.subr.bf16.mxu0 0
  %80 = vmatpush2.bf16.msra.mxu0 0
  %81 = vmatprep.subr.bf16.mxu0 0
  %82 = vmatpush2.bf16.msra.mxu0 0
  %83 = vmatprep.subr.bf16.mxu0 0
  %84 = vmatpush2.bf16.msra.mxu0 0
  %85 = vmatprep.subr.bf16.mxu0 0
  %86 = vmatpush2.bf16.msra.mxu0 0
  %87 = vmatprep.mubr.bf16.mxu0 0
  %88 = vmatmul.mubr.bf16.gmra.mxu0 %v49
  %v89 = vpop.f32.mrf.mxu0
  %v90 = vadd.f32 0.0, %v89
  %v91 = vpop.f32.mrf.mxu0
  %v92 = vpop.f32.mrf.mxu0
  %v93 = vpop.f32.mrf.mxu0
  %94 = vdwg.mxu0
  %v96 = vsel %vm51, %v46, 0
  %98 = vmatprep.subr.bf16.mxu0 0
  %99 = vmatpush1.bf16.msra.mxu0 0
  %100 = vmatprep.subr.bf16.mxu0 0
  %101 = vmatpush1.bf16.msra.mxu0 0
  %102 = vmatprep.subr.bf16.mxu0 0
  %103 = vmatpush1.bf16.msra.mxu0 0
  %104 = vmatprep.subr.bf16.mxu0 0
  %105 = vmatpush1.bf16.msra.mxu0 0
  %106 = vmatprep.subr.bf16.mxu0 0
  %107 = vmatpush1.bf16.msra.mxu0 0
  %108 = vmatprep.subr.bf16.mxu0 0
  %109 = vmatpush1.bf16.msra.mxu0 0
  %110 = vmatprep.subr.bf16.mxu0 0
  %111 = vmatpush1.bf16.msra.mxu0 0
  %112 = vmatprep.subr.bf16.mxu0 0
  %113 = vmatpush1.bf16.msra.mxu0 %v96
  %114 = vmatprep.subr.bf16.mxu0 0
  %115 = vmatpush2.bf16.msra.mxu0 0
  %116 = vmatprep.subr.bf16.mxu0 0
  %117 = vmatpush2.bf16.msra.mxu0 0
  %118 = vmatprep.subr.bf16.mxu0 0
  %119 = vmatpush2.bf16.msra.mxu0 0
  %120 = vmatprep.subr.bf16.mxu0 0
  %121 = vmatpush2.bf16.msra.mxu0 0
  %122 = vmatprep.subr.bf16.mxu0 0
  %123 = vmatpush2.bf16.msra.mxu0 0
  %124 = vmatprep.subr.bf16.mxu0 0
  %125 = vmatpush2.bf16.msra.mxu0 0
  %126 = vmatprep.subr.bf16.mxu0 0
  %127 = vmatpush2.bf16.msra.mxu0 0
  %128 = vmatprep.subr.bf16.mxu0 0
  %129 = vmatpush2.bf16.msra.mxu0 0
  %130 = vmatprep.mubr.bf16.mxu0 0
  %131 = vmatmul.mubr.bf16.gmra.mxu0 %v49
  %v132 = vpop.f32.mrf.mxu0
  %v133 = vadd.f32 0.0, %v132
  %v134 = vpop.f32.mrf.mxu0
  %v135 = vpop.f32.mrf.mxu0
  %v136 = vpop.f32.mrf.mxu0
  %137 = vdwg.mxu0
  %v138 = vpack.c.bf16 %v133, %v90
  %v139 = vld [vmem:[%s2] sm:$0xf]
  %v140 = vld [vmem:[%s2 + $0x4] sm:$0xf]
  %v143 = vunpack.c.l.b16 %v139
  %v144 = vunpack.c.l.b16 %v140
  %v145 = vpack.c.b16 %v144, %v143
  %vm147 = vcmask 130048
  %v149 = vsel %vm147, %v138, 0
  %151 = vmatprep.subr.bf16.mxu0 0
  %152 = vmatpush1.bf16.msra.mxu0 0
  %153 = vmatprep.subr.bf16.mxu0 0
  %154 = vmatpush1.bf16.msra.mxu0 0
  %155 = vmatprep.subr.bf16.mxu0 0
  %156 = vmatpush1.bf16.msra.mxu0 0
  %157 = vmatprep.subr.bf16.mxu0 0
  %158 = vmatpush1.bf16.msra.mxu0 0
  %159 = vmatprep.subr.bf16.mxu0 0
  %160 = vmatpush1.bf16.msra.mxu0 0
  %161 = vmatprep.subr.bf16.mxu0 0
  %162 = vmatpush1.bf16.msra.mxu0 0
  %163 = vmatprep.subr.bf16.mxu0 0
  %164 = vmatpush1.bf16.msra.mxu0 0
  %165 = vmatprep.subr.bf16.mxu0 0
  %166 = vmatpush1.bf16.msra.mxu0 %v145
  %167 = vmatprep.subr.bf16.mxu0 0
  %168 = vmatpush2.bf16.msra.mxu0 0
  %169 = vmatprep.subr.bf16.mxu0 0
  %170 = vmatpush2.bf16.msra.mxu0 0
  %171 = vmatprep.subr.bf16.mxu0 0
  %172 = vmatpush2.bf16.msra.mxu0 0
  %173 = vmatprep.subr.bf16.mxu0 0
  %174 = vmatpush2.bf16.msra.mxu0 0
  %175 = vmatprep.subr.bf16.mxu0 0
  %176 = vmatpush2.bf16.msra.mxu0 0
  %177 = vmatprep.subr.bf16.mxu0 0
  %178 = vmatpush2.bf16.msra.mxu0 0
  %179 = vmatprep.subr.bf16.mxu0 0
  %180 = vmatpush2.bf16.msra.mxu0 0
  %181 = vmatprep.subr.bf16.mxu0 0
  %182 = vmatpush2.bf16.msra.mxu0 0
  %183 = vmatprep.mubr.bf16.mxu0 0
  %184 = vmatmul.mubr.bf16.gmra.mxu0 %v149
  %v185 = vpop.f32.mrf.mxu0
  %v186 = vadd.f32 0.0, %v185
  %v187 = vpop.f32.mrf.mxu0
  %v188 = vpop.f32.mrf.mxu0
  %v189 = vadd.f32 0.0, %v188
  %v190 = vpop.f32.mrf.mxu0
  %191 = vdwg.mxu0
  %v192 = vmax.f32 %v186, 0.0
  %v193 = vmax.f32 %v189, 0.0
  %v194 = vpack.c.bf16 %v193, %v192
  %v195 = vld [vmem:[%s3] sm:$0xf]
  %v196 = vld [vmem:[%s3 + $0x4] sm:$0xf]
  %v197 = vld [vmem:[%s3 + $0x8] sm:$0xf]
  %v198 = vld [vmem:[%s3 + $0xc] sm:$0xf]
  %v199 = vld [vmem:[%s3 + $0x10] sm:$0xf]
  %v200 = vld [vmem:[%s3 + $0x14] sm:$0xf]
  %v201 = vld [vmem:[%s3 + $0x18] sm:$0xf]
  %v202 = vld [vmem:[%s3 + $0x1c] sm:$0xf]
  %v203 = vld [vmem:[%s3 + $0x20] sm:$0xf]
  %v204 = vld [vmem:[%s3 + $0x24] sm:$0xf]
  %v205 = vld [vmem:[%s3 + $0x28] sm:$0xf]
  %v206 = vld [vmem:[%s3 + $0x2c] sm:$0xf]
  %v207 = vld [vmem:[%s3 + $0x30] sm:$0xf]
  %v208 = vld [vmem:[%s3 + $0x34] sm:$0xf]
  %v209 = vld [vmem:[%s3 + $0x38] sm:$0xf]
  %v210 = vld [vmem:[%s3 + $0x3c] sm:$0xf]
  %v227 = vunpack.c.l.b16 %v195
  %v228 = vunpack.c.l.b16 %v196
  %v229 = vunpack.c.l.b16 %v197
  %v230 = vunpack.c.l.b16 %v198
  %v231 = vunpack.c.l.b16 %v199
  %v232 = vunpack.c.l.b16 %v200
  %v233 = vunpack.c.l.b16 %v201
  %v234 = vunpack.c.l.b16 %v202
  %v235 = vunpack.c.l.b16 %v203
  %v236 = vunpack.c.l.b16 %v204
  %v237 = vunpack.c.l.b16 %v205
  %v238 = vunpack.c.l.b16 %v206
  %v239 = vunpack.c.l.b16 %v207
  %v240 = vunpack.c.l.b16 %v208
  %v241 = vunpack.c.l.b16 %v209
  %v242 = vunpack.c.l.b16 %v210
  %v243 = vpack.c.b16 %v228, %v227
  %v244 = vpack.c.b16 %v230, %v229
  %v245 = vpack.c.b16 %v232, %v231
  %v246 = vpack.c.b16 %v234, %v233
  %v247 = vpack.c.b16 %v236, %v235
  %v248 = vpack.c.b16 %v238, %v237
  %v249 = vpack.c.b16 %v240, %v239
  %v250 = vpack.c.b16 %v242, %v241
  %259 = vmatprep.subr.bf16.mxu0 0
  %260 = vmatpush1.bf16.msra.mxu0 %v250
  %261 = vmatprep.subr.bf16.mxu0 0
  %262 = vmatpush1.bf16.msra.mxu0 %v249
  %263 = vmatprep.subr.bf16.mxu0 0
  %264 = vmatpush1.bf16.msra.mxu0 %v248
  %265 = vmatprep.subr.bf16.mxu0 0
  %266 = vmatpush1.bf16.msra.mxu0 %v247
  %267 = vmatprep.subr.bf16.mxu0 0
  %268 = vmatpush1.bf16.msra.mxu0 %v246
  %269 = vmatprep.subr.bf16.mxu0 0
  %270 = vmatpush1.bf16.msra.mxu0 %v245
  %271 = vmatprep.subr.bf16.mxu0 0
  %272 = vmatpush1.bf16.msra.mxu0 %v244
  %273 = vmatprep.subr.bf16.mxu0 0
  %274 = vmatpush1.bf16.msra.mxu0 %v243
  %275 = vmatprep.subr.bf16.mxu0 0
  %276 = vmatpush2.bf16.msra.mxu0 0
  %277 = vmatprep.subr.bf16.mxu0 0
  %278 = vmatpush2.bf16.msra.mxu0 0
  %279 = vmatprep.subr.bf16.mxu0 0
  %280 = vmatpush2.bf16.msra.mxu0 0
  %281 = vmatprep.subr.bf16.mxu0 0
  %282 = vmatpush2.bf16.msra.mxu0 0
  %283 = vmatprep.subr.bf16.mxu0 0
  %284 = vmatpush2.bf16.msra.mxu0 0
  %285 = vmatprep.subr.bf16.mxu0 0
  %286 = vmatpush2.bf16.msra.mxu0 0
  %287 = vmatprep.subr.bf16.mxu0 0
  %288 = vmatpush2.bf16.msra.mxu0 0
  %289 = vmatprep.subr.bf16.mxu0 0
  %290 = vmatpush2.bf16.msra.mxu0 0
  %291 = vmatprep.mubr.bf16.mxu0 0
  %292 = vmatmul.mubr.bf16.gmra.mxu0 %v194
  %v293 = vpop.f32.mrf.mxu0
  %v294 = vadd.f32 0.0, %v293
  %v295 = vpop.f32.mrf.mxu0
  %v296 = vpop.f32.mrf.mxu0
  %v297 = vadd.f32 0.0, %v296
  %v298 = vpop.f32.mrf.mxu0
  %299 = vdwg.mxu0
  %v300 = vpack.c.bf16 %v297, %v294
  %v302 = vsel %vm51, %v300, 0
  %304 = vmatprep.subr.bf16.mxu0 0
  %305 = vmatpush1.bf16.msra.mxu0 0
  %306 = vmatprep.subr.bf16.mxu0 0
  %307 = vmatpush1.bf16.msra.mxu0 0
  %308 = vmatprep.subr.bf16.mxu0 0
  %309 = vmatpush1.bf16.msra.mxu0 0
  %310 = vmatprep.subr.bf16.mxu0 0
  %311 = vmatpush1.bf16.msra.mxu0 0
  %312 = vmatprep.subr.bf16.mxu0 0
  %313 = vmatpush1.bf16.msra.mxu0 0
  %314 = vmatprep.subr.bf16.mxu0 0
  %315 = vmatpush1.bf16.msra.mxu0 0
  %316 = vmatprep.subr.bf16.mxu0 0
  %317 = vmatpush1.bf16.msra.mxu0 0
  %318 = vmatprep.subr.bf16.mxu0 0
  %319 = vmatpush1.bf16.msra.mxu0 %v302
  %320 = vmatprep.subr.bf16.mxu0 0
  %321 = vmatpush2.bf16.msra.mxu0 0
  %322 = vmatprep.subr.bf16.mxu0 0
  %323 = vmatpush2.bf16.msra.mxu0 0
  %324 = vmatprep.subr.bf16.mxu0 0
  %325 = vmatpush2.bf16.msra.mxu0 0
  %326 = vmatprep.subr.bf16.mxu0 0
  %327 = vmatpush2.bf16.msra.mxu0 0
  %328 = vmatprep.subr.bf16.mxu0 0
  %329 = vmatpush2.bf16.msra.mxu0 0
  %330 = vmatprep.subr.bf16.mxu0 0
  %331 = vmatpush2.bf16.msra.mxu0 0
  %332 = vmatprep.subr.bf16.mxu0 0
  %333 = vmatpush2.bf16.msra.mxu0 0
  %334 = vmatprep.subr.bf16.mxu0 0
  %335 = vmatpush2.bf16.msra.mxu0 0
  %336 = vmatprep.mubr.bf16.mxu0 0
  %337 = vmatmul.mubr.bf16.gmra.mxu0 %v49
  %v338 = vpop.f32.mrf.mxu0
  %v339 = vadd.f32 0.0, %v338
  %v340 = vpop.f32.mrf.mxu0
  %v341 = vpop.f32.mrf.mxu0
  %v342 = vpop.f32.mrf.mxu0
  %343 = vdwg.mxu0
  %344 = vst [vmem:[%s6] sm:$0xff] %v339
  %v346 = vrot.slane %v300, 4
  %v348 = vsel %vm51, %v346, 0
  %350 = vmatprep.subr.bf16.mxu0 0
  %351 = vmatpush1.bf16.msra.mxu0 0
  %352 = vmatprep.subr.bf16.mxu0 0
  %353 = vmatpush1.bf16.msra.mxu0 0
  %354 = vmatprep.subr.bf16.mxu0 0
  %355 = vmatpush1.bf16.msra.mxu0 0
  %356 = vmatprep.subr.bf16.mxu0 0
  %357 = vmatpush1.bf16.msra.mxu0 0
  %358 = vmatprep.subr.bf16.mxu0 0
  %359 = vmatpush1.bf16.msra.mxu0 0
  %360 = vmatprep.subr.bf16.mxu0 0
  %361 = vmatpush1.bf16.msra.mxu0 0
  %362 = vmatprep.subr.bf16.mxu0 0
  %363 = vmatpush1.bf16.msra.mxu0 0
  %364 = vmatprep.subr.bf16.mxu0 0
  %365 = vmatpush1.bf16.msra.mxu0 %v348
  %366 = vmatprep.subr.bf16.mxu0 0
  %367 = vmatpush2.bf16.msra.mxu0 0
  %368 = vmatprep.subr.bf16.mxu0 0
  %369 = vmatpush2.bf16.msra.mxu0 0
  %370 = vmatprep.subr.bf16.mxu0 0
  %371 = vmatpush2.bf16.msra.mxu0 0
  %372 = vmatprep.subr.bf16.mxu0 0
  %373 = vmatpush2.bf16.msra.mxu0 0
  %374 = vmatprep.subr.bf16.mxu0 0
  %375 = vmatpush2.bf16.msra.mxu0 0
  %376 = vmatprep.subr.bf16.mxu0 0
  %377 = vmatpush2.bf16.msra.mxu0 0
  %378 = vmatprep.subr.bf16.mxu0 0
  %379 = vmatpush2.bf16.msra.mxu0 0
  %380 = vmatprep.subr.bf16.mxu0 0
  %381 = vmatpush2.bf16.msra.mxu0 0
  %382 = vmatprep.mubr.bf16.mxu0 0
  %383 = vmatmul.mubr.bf16.gmra.mxu0 %v49
  %v384 = vpop.f32.mrf.mxu0
  %v385 = vadd.f32 0.0, %v384
  %v386 = vpop.f32.mrf.mxu0
  %v387 = vpop.f32.mrf.mxu0
  %v388 = vpop.f32.mrf.mxu0
  %389 = vdwg.mxu0
  %s390 = scalar_lea.vmem %s6, 8
  %391 = vst [vmem:[%s390] sm:$0xff] %v385
  // Predicated region
  $region26: #{gnn_forward.3} parent=0 // pred_check
    _
  $region27: #{gnn_forward.3} parent=0 // pred_check_branch
    %393 = sbr.rel (0) target = $region29
  $region28: #{gnn_forward.3} parent=0 // pred_region
    _
  $region29: #{gnn_forward.3} parent=0 // pred_fallthru
    _
  // Predicated region
  $region30: #{gnn_forward.3} parent=0 // pred_check
    _
  $region31: #{gnn_forward.3} parent=0 // pred_check_branch
    %395 = sbr.rel (0) target = $region33
  $region32: #{gnn_forward.3} parent=0 // pred_region
    _
  $region33: #{gnn_forward.3} parent=0 // pred_fallthru
    _

</llo_original>
